<compile_context>
chip_gen: v7x
topology: tpu7x:2x2x1
jax: 0.10.0
libtpu: 0.0.40
codegen_flags: <defaults>
</compile_context>

<pallas_src>
import math

import jax
import jax.numpy as jnp
from jax.experimental import pallas as pl
from jax.experimental.pallas import tpu as pltpu

_INV_SQRT2 = 1.0 / math.sqrt(2.0)


def _soft_decision_kernel(x_ref, w1_ref, b1_ref, dw_ref, db_ref, out_ref):
    # x_ref : (tile_b, D)        -- streamed input tile (batch on sublanes)
    # w1_ref: (H, D)             -- PyTorch layout (out_features, in_features)
    # b1_ref: (H, 1)  f32
    # dw_ref: (H, 1)  f32        -- w2[1] - w2[0]
    # db_ref: (1, 1)  f32        -- b2[1] - b2[0]
    # out_ref: (2, tile_b) f32   -- lane-dense probabilities [p_left; p_right]
    x = x_ref[...]                                   # (tb, D)
    w1 = w1_ref[...]                                 # (H, D)

    # h_t[h, b] = sum_d w1[h, d] * x[b, d]  -> (H, tb); batch lands on lanes.
    h_t = jax.lax.dot_general(
        w1, x,
        dimension_numbers=(((1,), (1,)), ((), ())),
        preferred_element_type=jnp.float32,
    )
    h_t = h_t + b1_ref[...]                          # (H, 1) lane-broadcast

    # Exact GELU (PyTorch nn.GELU default): 0.5 * h * (1 + erf(h / sqrt(2)))
    h_t = 0.5 * h_t * (1.0 + jax.lax.erf(h_t * _INV_SQRT2))

    # Logit difference d = l1 - l0 : elementwise mul + sublane reduce (VPU+XLU).
    d_t = jnp.sum(h_t * dw_ref[...], axis=0, keepdims=True) + db_ref[...]  # (1,tb)

    # 2-class softmax == sigmoid of the logit difference.  Both halves computed
    # with their own exp so relative precision matches the reference softmax.
    p_right = 1.0 / (1.0 + jnp.exp(-d_t))            # (1, tb)
    p_left = 1.0 / (1.0 + jnp.exp(d_t))              # (1, tb)

    out_ref[0:1, :] = p_left.astype(out_ref.dtype)
    out_ref[1:2, :] = p_right.astype(out_ref.dtype)


def _choose_tiling(batch, d, itemsize):
    """Returns (tile_b, x_buffer_count)."""
    # Small batches: a single grid step; the call is per-step-overhead-dominated
    # and the whole tile trivially fits VMEM.
    if batch <= 256 and 2 * batch * d * itemsize <= (16 << 20):
        return batch, 2
    # Multi-step path.  tile_b must be a multiple of 128 (lane axis of the
    # lane-dense (2, tile_b) output block).  Size it so the x pipeline buffers
    # fit a budget that is safe on v5e (16 MiB default scoped VMEM), v6e
    # (32 MiB default) and v7x (64 MiB physical per TC).
    x_buffers = 3
    x_budget = 9 << 20                               # all x buffers combined
    cap = (x_budget // (x_buffers * d * itemsize)) // 128 * 128
    cap = max(128, min(1024, cap))
    # Aim for >= 2 grid steps so the "parallel" axis can be megacore-sharded
    # on v7x, without exceeding the VMEM-derived cap.
    want = ((-(-batch // 2)) + 127) // 128 * 128     # round_up(ceil(B/2), 128)
    return max(128, min(cap, want)), x_buffers


def soft_decision_node(x, w1, b1, w2, b2, *, use_bf16=False):
    """Forward pass of SoftDecisionNode.

    x : (B, D) float32
    w1: (H, D), b1: (H,)   -- PyTorch nn.Linear layout (out_features, in_features)
    w2: (2, H), b2: (2,)
    returns routing probabilities, shape (B, 2), rows sum to 1.
    """
    B, D = x.shape
    H, D2 = w1.shape
    assert D2 == D and w2.shape == (2, H) and b2.shape == (2,)

    in_dtype = jnp.bfloat16 if use_bf16 else jnp.float32
    x_in = x.astype(in_dtype)
    w1_in = w1.astype(in_dtype)
    b1c = b1.reshape(H, 1).astype(jnp.float32)
    dw = (w2[1] - w2[0]).reshape(H, 1).astype(jnp.float32)
    db = (b2[1] - b2[0]).reshape(1, 1).astype(jnp.float32)

    itemsize = jnp.dtype(in_dtype).itemsize
    tile_b, x_buffers = _choose_tiling(B, D, itemsize)
    num_steps = pl.cdiv(B, tile_b)

    # x: the only streamed operand; 3-deep pipelining when there are enough
    # grid steps for it to matter.
    if num_steps >= 3:
        x_spec = pl.BlockSpec((tile_b, D), lambda i: (i, 0),
                              pipeline_mode=pl.Buffered(x_buffers))
        x_bufs_used = x_buffers
    else:
        x_spec = pl.BlockSpec((tile_b, D), lambda i: (i, 0))
        x_bufs_used = min(2, num_steps) if num_steps > 0 else 1

    # Grid-invariant operands: single-buffered (no redundant second W1 copy).
    def _resident(shape):
        return pl.BlockSpec(shape, lambda i: (0, 0),
                            pipeline_mode=pl.Buffered(1))

    # Explicit scoped-VMEM limit sized from the real footprint (with headroom).
    x_bytes = x_bufs_used * tile_b * D * itemsize
    w_bytes = 2 * H * D * itemsize          # headroom even though single-buffered
    out_bytes = 2 * (2 * tile_b * 4)
    misc_bytes = 8 * H * 4 + (1 << 20)
    vmem_limit = int(1.25 * (x_bytes + w_bytes + out_bytes + misc_bytes))
    vmem_limit = min(max(vmem_limit, 16 << 20), 64 << 20)

    probs_t = pl.pallas_call(
        _soft_decision_kernel,
        out_shape=jax.ShapeDtypeStruct((2, B), jnp.float32),
        grid_spec=pltpu.PrefetchScalarGridSpec(
            num_scalar_prefetch=0,
            grid=(num_steps,),
            in_specs=[
                x_spec,                    # x (only streamed input)
                _resident((H, D)),         # W1 (resident, single-buffered)
                _resident((H, 1)),         # b1
                _resident((H, 1)),         # dw = w2[1] - w2[0]
                _resident((1, 1)),         # db = b2[1] - b2[0]
            ],
            out_specs=pl.BlockSpec((2, tile_b), lambda i: (0, i)),  # lane-dense
        ),
        compiler_params=pltpu.CompilerParams(
            dimension_semantics=("parallel",),
            vmem_limit_bytes=vmem_limit,
        ),
    )(x_in, w1_in, b1c, dw, db)

    # Lane-dense (2, B) -> module's (B, 2); trivial 8-bytes/row transpose.
    return probs_t.T


def init_params(key, input_dim, hidden_dim=32):
    """Deterministic init mirroring nn.Linear shapes (PyTorch (out,in) layout)."""
    k1, k2, k3, k4 = jax.random.split(key, 4)
    lim1 = 1.0 / math.sqrt(input_dim)
    lim2 = 1.0 / math.sqrt(hidden_dim)
    w1 = jax.random.uniform(k1, (hidden_dim, input_dim), jnp.float32, -lim1, lim1)
    b1 = jax.random.uniform(k2, (hidden_dim,), jnp.float32, -lim1, lim1)
    w2 = jax.random.uniform(k3, (2, hidden_dim), jnp.float32, -lim2, lim2)
    b2 = jax.random.uniform(k4, (2,), jnp.float32, -lim2, lim2)
    return w1, b1, w2, b2


def _reference(x, w1, b1, w2, b2):
    h = jnp.dot(x, w1.T) + b1
    h = 0.5 * h * (1.0 + jax.lax.erf(h / math.sqrt(2.0)))
    logits = jnp.dot(h, w2.T) + b2
    return jax.nn.softmax(logits, axis=-1)


if __name__ == "__main__":
    input_dim, hidden_dim = 32, 32
    key = jax.random.PRNGKey(0)
    kx, kp = jax.random.split(key)
    w1, b1, w2, b2 = init_params(kp, input_dim, hidden_dim)

    # Primary small case: batch=8, single grid step, exact full-dim blocks.
    x = jax.random.normal(kx, (8, input_dim), jnp.float32)
    probs = soft_decision_node(x, w1, b1, w2, b2)
    jax.block_until_ready(probs)
    ref = _reference(x, w1, b1, w2, b2)
    assert probs.shape == (8, 2)
    assert jnp.allclose(probs, ref, atol=2e-5, rtol=2e-5)
    assert jnp.allclose(jnp.sum(probs, axis=-1), 1.0, atol=1e-5)

    # Mid-size ragged case: 2 grid steps, ragged last block, no host-side pad.
    xb = jax.random.normal(jax.random.PRNGKey(1), (300, input_dim), jnp.float32)
    pb = soft_decision_node(xb, w1, b1, w2, b2)
    jax.block_until_ready(pb)
    assert pb.shape == (300, 2)
    assert jnp.allclose(pb, _reference(xb, w1, b1, w2, b2), atol=2e-5, rtol=2e-5)

    # Larger case: >= 3 grid steps -> Buffered(3) x pipeline + ragged last block.
    xc = jax.random.normal(jax.random.PRNGKey(2), (2600, input_dim), jnp.float32)
    pc = soft_decision_node(xc, w1, b1, w2, b2)
    jax.block_until_ready(pc)
    assert pc.shape == (2600, 2)
    assert jnp.allclose(pc, _reference(xc, w1, b1, w2, b2), atol=2e-5, rtol=2e-5)

    print("KERNEL_OK")
</pallas_src>

<mosaic_0001>
module attributes {stable_mosaic.version = 11 : i64} {
  func.func @_soft_decision_kernel(%arg0: i32, %arg1: memref<8x32xf32, #tpu.memory_space<vmem>>, %arg2: memref<32x32xf32, #tpu.memory_space<vmem>>, %arg3: memref<32x1xf32, #tpu.memory_space<vmem>>, %arg4: memref<32x1xf32, #tpu.memory_space<vmem>>, %arg5: memref<1x1xf32, #tpu.memory_space<vmem>>, %arg6: memref<2x8xf32, #tpu.memory_space<vmem>>) attributes {dimension_semantics = [#tpu.dimension_semantics<parallel>], iteration_bounds = array<i64: 1>, scalar_prefetch = 0 : i64, scratch_operands = 0 : i64, tpu.core_type = #tpu.core_type<tc>, window_params = [{transform_indices = @transform_0, window_bounds = array<i64: 8, 32>}, {pipeline_mode = #tpu.pipeline_mode<synchronous>, transform_indices = @transform_1, window_bounds = array<i64: 32, 32>}, {pipeline_mode = #tpu.pipeline_mode<synchronous>, transform_indices = @transform_2, window_bounds = array<i64: 32, 1>}, {pipeline_mode = #tpu.pipeline_mode<synchronous>, transform_indices = @transform_3, window_bounds = array<i64: 32, 1>}, {pipeline_mode = #tpu.pipeline_mode<synchronous>, transform_indices = @transform_4, window_bounds = array<i64: 1, 1>}, {transform_indices = @transform_5, window_bounds = array<i64: 2, 8>}]} {
    %c0 = arith.constant 0 : index
    %c0_0 = arith.constant 0 : index
    %0 = vector.load %arg1[%c0, %c0_0] : memref<8x32xf32, #tpu.memory_space<vmem>>, vector<8x32xf32>
    %c0_1 = arith.constant 0 : index
    %c0_2 = arith.constant 0 : index
    %1 = vector.load %arg2[%c0_1, %c0_2] : memref<32x32xf32, #tpu.memory_space<vmem>>, vector<32x32xf32>
    %cst = arith.constant dense<0.000000e+00> : vector<32x8xf32>
    %2 = tpu.matmul %1, %0, %cst {dimension_numbers = #tpu.dot_dimension_numbers<[1], [1], [0], [0], [0, 0, 1, 0], [], []>} : vector<32x32xf32>, vector<8x32xf32>, vector<32x8xf32> -> vector<32x8xf32>
    %c0_3 = arith.constant 0 : index
    %c0_4 = arith.constant 0 : index
    %3 = vector.load %arg3[%c0_3, %c0_4] : memref<32x1xf32, #tpu.memory_space<vmem>>, vector<32x1xf32>
    %4 = vector.broadcast %3 : vector<32x1xf32> to vector<32x8xf32>
    %5 = arith.addf %2, %4 : vector<32x8xf32>
    %cst_5 = arith.constant 5.000000e-01 : f32
    %6 = vector.broadcast %cst_5 : f32 to vector<32x8xf32>
    %7 = arith.mulf %6, %5 : vector<32x8xf32>
    %cst_6 = arith.constant 0.707106769 : f32
    %8 = vector.broadcast %cst_6 : f32 to vector<32x8xf32>
    %9 = arith.mulf %5, %8 : vector<32x8xf32>
    %10 = math.erf %9 : vector<32x8xf32>
    %cst_7 = arith.constant 1.000000e+00 : f32
    %11 = vector.broadcast %cst_7 : f32 to vector<32x8xf32>
    %12 = arith.addf %11, %10 : vector<32x8xf32>
    %13 = arith.mulf %7, %12 : vector<32x8xf32>
    %c0_8 = arith.constant 0 : index
    %c0_9 = arith.constant 0 : index
    %14 = vector.load %arg4[%c0_8, %c0_9] : memref<32x1xf32, #tpu.memory_space<vmem>>, vector<32x1xf32>
    %15 = vector.broadcast %14 : vector<32x1xf32> to vector<32x8xf32>
    %16 = arith.mulf %13, %15 : vector<32x8xf32>
    %cst_10 = arith.constant dense<0.000000e+00> : vector<8xf32>
    %17 = vector.multi_reduction <add>, %16, %cst_10 [0] : vector<32x8xf32> to vector<8xf32>
    %18 = vector.shape_cast %17 : vector<8xf32> to vector<1x8xf32>
    %c0_11 = arith.constant 0 : index
    %c0_12 = arith.constant 0 : index
    %19 = vector.load %arg5[%c0_11, %c0_12] : memref<1x1xf32, #tpu.memory_space<vmem>>, vector<1x1xf32>
    %20 = vector.broadcast %19 : vector<1x1xf32> to vector<1x8xf32>
    %21 = arith.addf %18, %20 : vector<1x8xf32>
    %cst_13 = arith.constant 0.000000e+00 : f32
    %22 = vector.broadcast %cst_13 : f32 to vector<1x8xf32>
    %23 = arith.subf %22, %21 : vector<1x8xf32>
    %24 = math.exp %23 : vector<1x8xf32>
    %cst_14 = arith.constant 1.000000e+00 : f32
    %25 = vector.broadcast %cst_14 : f32 to vector<1x8xf32>
    %26 = arith.addf %25, %24 : vector<1x8xf32>
    %cst_15 = arith.constant 1.000000e+00 : f32
    %27 = vector.broadcast %cst_15 : f32 to vector<1x8xf32>
    %28 = arith.divf %27, %26 : vector<1x8xf32>
    %29 = math.exp %21 : vector<1x8xf32>
    %cst_16 = arith.constant 1.000000e+00 : f32
    %30 = vector.broadcast %cst_16 : f32 to vector<1x8xf32>
    %31 = arith.addf %30, %29 : vector<1x8xf32>
    %cst_17 = arith.constant 1.000000e+00 : f32
    %32 = vector.broadcast %cst_17 : f32 to vector<1x8xf32>
    %33 = arith.divf %32, %31 : vector<1x8xf32>
    %c0_18 = arith.constant 0 : index
    %c0_19 = arith.constant 0 : index
    %34 = vector.load %arg6[%c0_18, %c0_19] : memref<2x8xf32, #tpu.memory_space<vmem>>, vector<1x8xf32>
    tpu.vector_store %arg6[%c0_18, %c0_19], %33 {strides = array<i32>} : memref<2x8xf32, #tpu.memory_space<vmem>>, vector<1x8xf32>,
    %c1 = arith.constant 1 : index
    %c0_20 = arith.constant 0 : index
    %35 = vector.load %arg6[%c1, %c0_20] : memref<2x8xf32, #tpu.memory_space<vmem>>, vector<1x8xf32>
    tpu.vector_store %arg6[%c1, %c0_20], %28 {strides = array<i32>} : memref<2x8xf32, #tpu.memory_space<vmem>>, vector<1x8xf32>,
    return
  }
  func.func @transform_0(%arg0: i32) -> (i32, i32) {
    %c0_i32 = arith.constant 0 : i32
    %c0_i32_0 = arith.constant 0 : i32
    return %arg0, %c0_i32 : i32, i32
  }
  func.func @transform_1(%arg0: i32) -> (i32, i32) {
    %c0_i32 = arith.constant 0 : i32
    %c0_i32_0 = arith.constant 0 : i32
    %c0_i32_1 = arith.constant 0 : i32
    return %c0_i32, %c0_i32_0 : i32, i32
  }
  func.func @transform_2(%arg0: i32) -> (i32, i32) {
    %c0_i32 = arith.constant 0 : i32
    %c0_i32_0 = arith.constant 0 : i32
    %c0_i32_1 = arith.constant 0 : i32
    return %c0_i32, %c0_i32_0 : i32, i32
  }
  func.func @transform_3(%arg0: i32) -> (i32, i32) {
    %c0_i32 = arith.constant 0 : i32
    %c0_i32_0 = arith.constant 0 : i32
    %c0_i32_1 = arith.constant 0 : i32
    return %c0_i32, %c0_i32_0 : i32, i32
  }
  func.func @transform_4(%arg0: i32) -> (i32, i32) {
    %c0_i32 = arith.constant 0 : i32
    %c0_i32_0 = arith.constant 0 : i32
    %c0_i32_1 = arith.constant 0 : i32
    return %c0_i32, %c0_i32_0 : i32, i32
  }
  func.func @transform_5(%arg0: i32) -> (i32, i32) {
    %c0_i32 = arith.constant 0 : i32
    %c0_i32_0 = arith.constant 0 : i32
    return %c0_i32, %arg0 : i32, i32
  }
}

</mosaic_0001>

<llo_original>
// kernel: tpu_custom_call.1
$region0: #{tpu_custom_call.1}
  #allocation0 [shape = 'u32[]', space=smem, size = 0x4, offset = 0x4, fixed_abs, tag = 'smem constant byte address 0x4 - core index']
  #allocation1 [shape = 'u32[144,128]{1,0:T(1,128)}', space=vmem, size = 0x12000, scoped, tag = 'internal scratch']
  #allocation2 [shape = 'f32[1,1]{1,0:T(1,128)S(1)}', space=vmem, size = 0x200, scoped, tag = 'scoped memory for tpu_custom_call.1']
  %s0 = inlined_call_operand.vmem [shape: f32[8,32], index: 0, kind: input, shape index: {}]
  %s1 = inlined_call_operand.vmem [shape: f32[32,32], index: 1, kind: input, shape index: {}]
  %s2 = inlined_call_operand.vmem [shape: f32[32,1], index: 2, kind: input, shape index: {}]
  %s3 = inlined_call_operand.vmem [shape: f32[32,1], index: 3, kind: input, shape index: {}]
  %s4 = inlined_call_operand.<no memory space> [shape: f32[1,1], index: 4, kind: input, shape index: {}]
  %s5 = inlined_call_operand.hbm [shape: f32[2,8], index: 5, kind: output, shape index: {}]
  %s6 = sld [smem:[#allocation0]]
  $region30: #{tpu_custom_call.1} parent=0
    _
  %s8 = ssub.s32 1, %s6
  %s9 = scalar_select 0, %s8, %s6
  %v10 = vstv %s4
  %11 = vst [vmem:[#allocation2] sm:$0x1] %v10
  $region1: #{tpu_custom_call.1} parent=0
    #allocation3 [shape = 'u8[1024]{0}', space=vmem, size = 0x400, scoped, tag = 'output window, operand 0, single buffered']
    #allocation4 [shape = 's32[1]{0}', space=sflag, size = 0x4, scoped, tag = 'scoped memory for tpu_custom_call.1']
    %12 = vsyncpa [#allocation4], 0
    // Predicated region
    $region2: #{tpu_custom_call.1} parent=1 // pred_check
      _
    $region3: #{tpu_custom_call.1} parent=1 // pred_check_branch
      %14 = sbr.rel (0) target = $region5
    $region4: #{tpu_custom_call.1} parent=1 // pred_region
      _
    $region5: #{tpu_custom_call.1} parent=1 // pred_fallthru
      _
    // Predicated region
    $region6: #{tpu_custom_call.1} parent=1 // pred_check
      _
    $region7: #{tpu_custom_call.1} parent=1 // pred_check_branch
      %16 = sbr.rel (0) target = $region9
    $region8: #{tpu_custom_call.1} parent=1 // pred_region
      _
    $region9: #{tpu_custom_call.1} parent=1 // pred_fallthru
      _
    // Predicated region
    $region10: #{tpu_custom_call.1} parent=1 // pred_check
      _
    $region11: #{tpu_custom_call.1} parent=1 // pred_check_branch
      %18 = sbr.rel (0) target = $region13
    $region12: #{tpu_custom_call.1} parent=1 // pred_region
      _
    $region13: #{tpu_custom_call.1} parent=1 // pred_fallthru
      _
    // Predicated region
    $region14: #{tpu_custom_call.1} parent=1 // pred_check
      _
    $region15: #{tpu_custom_call.1} parent=1 // pred_check_branch
      %20 = sbr.rel (0) target = $region17
    $region16: #{tpu_custom_call.1} parent=1 // pred_region
      _
    $region17: #{tpu_custom_call.1} parent=1 // pred_fallthru
      _
    // Predicated region
    $region18: #{tpu_custom_call.1} parent=1 // pred_check
      _
    $region19: #{tpu_custom_call.1} parent=1 // pred_check_branch
      %22 = sbr.rel (0) target = $region21
    $region20: #{tpu_custom_call.1} parent=1 // pred_region
      _
    $region21: #{tpu_custom_call.1} parent=1 // pred_fallthru
      _
    %v23 = vld [vmem:[%s0] sm:$0xff]
    %v24 = vld [vmem:[%s1] sm:$0xff]
    %v25 = vld [vmem:[%s1 + $0x8] sm:$0xff]
    %v26 = vld [vmem:[%s1 + $0x10] sm:$0xff]
    %v27 = vld [vmem:[%s1 + $0x18] sm:$0xff]
    %v28 = vld [vmem:[%s2] sm:$0xff]
    %v29 = vld [vmem:[%s2 + $0x8] sm:$0xff]
    %v30 = vld [vmem:[%s2 + $0x10] sm:$0xff]
    %v31 = vld [vmem:[%s2 + $0x18] sm:$0xff]
    %33 = vset.pattern.permute.xlu0 0
    %34 = vperm.xlu0 %33, %v28
    %v35 = vpop.permute.xlu0 %34
    %38 = vset.pattern.permute.xlu0 0
    %39 = vperm.xlu0 %38, %v29
    %v40 = vpop.permute.xlu0 %39
    %43 = vset.pattern.permute.xlu0 0
    %44 = vperm.xlu0 %43, %v30
    %v45 = vpop.permute.xlu0 %44
    %48 = vset.pattern.permute.xlu0 0
    %49 = vperm.xlu0 %48, %v31
    %v50 = vpop.permute.xlu0 %49
    %vm52 = vcmask 261120
    %v54 = vsel %vm52, %v24, 0
    %v57 = vsel %vm52, %v25, 0
    %v60 = vsel %vm52, %v26, 0
    %v63 = vsel %vm52, %v27, 0
    %v66 = vsel %vm52, %v23, 0
    %68 = vmatprep.subr.mxu0 0.0
    %69 = vmatpush1.xpose.msra.mxu0 %v66
    %70 = vmatprep.subr.mxu0 0.0
    %71 = vmatpush1.xpose.msra.mxu0 0.0
    %72 = vmatprep.subr.mxu0 0.0
    %73 = vmatpush1.xpose.msra.mxu0 0.0
    %74 = vmatprep.subr.mxu0 0.0
    %75 = vmatpush1.xpose.msra.mxu0 0.0
    %76 = vmatprep.subr.mxu0 0.0
    %77 = vmatpush1.xpose.msra.mxu0 0.0
    %78 = vmatprep.subr.mxu0 0.0
    %79 = vmatpush1.xpose.msra.mxu0 0.0
    %80 = vmatprep.subr.mxu0 0.0
    %81 = vmatpush1.xpose.msra.mxu0 0.0
    %82 = vmatprep.subr.mxu0 0.0
    %83 = vmatpush1.xpose.msra.mxu0 0.0
    %84 = vmatprep.subr.mxu0 0.0
    %85 = vmatpush1.xpose.msra.mxu0 0.0
    %86 = vmatprep.subr.mxu0 0.0
    %87 = vmatpush1.xpose.msra.mxu0 0.0
    %88 = vmatprep.subr.mxu0 0.0
    %89 = vmatpush1.xpose.msra.mxu0 0.0
    %90 = vmatprep.subr.mxu0 0.0
    %91 = vmatpush1.xpose.msra.mxu0 0.0
    %92 = vmatprep.subr.mxu0 0.0
    %93 = vmatpush1.xpose.msra.mxu0 0.0
    %94 = vmatprep.subr.mxu0 0.0
    %95 = vmatpush1.xpose.msra.mxu0 0.0
    %96 = vmatprep.subr.mxu0 0.0
    %97 = vmatpush1.xpose.msra.mxu0 0.0
    %98 = vmatprep.subr.mxu0 0.0
    %99 = vmatpush1.xpose.msra.mxu0 0.0
    %100 = vmatprep.subr.mxu0 0.0
    %101 = vmatpush1.xpose.msra.mxu0 0.0
    %102 = vmatprep.subr.mxu0 0.0
    %103 = vmatpush1.xpose.msra.mxu0 0.0
    %104 = vmatprep.subr.mxu0 0.0
    %105 = vmatpush1.xpose.msra.mxu0 0.0
    %106 = vmatprep.subr.mxu0 0.0
    %107 = vmatpush1.xpose.msra.mxu0 0.0
    %108 = vmatprep.subr.mxu0 0.0
    %109 = vmatpush1.xpose.msra.mxu0 0.0
    %110 = vmatprep.subr.mxu0 0.0
    %111 = vmatpush1.xpose.msra.mxu0 0.0
    %112 = vmatprep.subr.mxu0 0.0
    %113 = vmatpush1.xpose.msra.mxu0 0.0
    %114 = vmatprep.subr.mxu0 0.0
    %115 = vmatpush1.xpose.msra.mxu0 0.0
    %116 = vmatprep.subr.mxu0 0.0
    %117 = vmatpush1.xpose.msra.mxu0 0.0
    %118 = vmatprep.subr.mxu0 0.0
    %119 = vmatpush1.xpose.msra.mxu0 0.0
    %120 = vmatprep.subr.mxu0 0.0
    %121 = vmatpush1.xpose.msra.mxu0 0.0
    %122 = vmatprep.subr.mxu0 0.0
    %123 = vmatpush1.xpose.msra.mxu0 0.0
    %124 = vmatprep.subr.mxu0 0.0
    %125 = vmatpush1.xpose.msra.mxu0 0.0
    %126 = vmatprep.subr.mxu0 0.0
    %127 = vmatpush1.xpose.msra.mxu0 0.0
    %128 = vmatprep.subr.mxu0 0.0
    %129 = vmatpush1.xpose.msra.mxu0 0.0
    %130 = vmatprep.subr.mxu0 0.0
    %131 = vmatpush1.xpose.msra.mxu0 0.0
    %132 = vmatprep.mubr.f32.mxu0 0.0
    %133 = vmatmul.mubr.f32.gmra.mrb[0].mxu0 %v54
    %v134 = vpop.f32.mrb[0].mxu0
    %v135 = vadd.f32 %v35, %v134
    %v136 = vpop.f32.mrb[0].mxu0
    %137 = vmatprep.mubr.f32.mxu0 0.0
    %138 = vmatmul.mubr.f32.gmra.mrb[0].mxu0 %v57
    %v139 = vpop.f32.mrb[0].mxu0
    %v140 = vadd.f32 %v40, %v139
    %v141 = vpop.f32.mrb[0].mxu0
    %142 = vmatprep.mubr.f32.mxu0 0.0
    %143 = vmatmul.mubr.f32.gmra.mrb[0].mxu0 %v60
    %v144 = vpop.f32.mrb[0].mxu0
    %v145 = vadd.f32 %v45, %v144
    %v146 = vpop.f32.mrb[0].mxu0
    %147 = vmatprep.mubr.f32.mxu0 0.0
    %148 = vmatmul.mubr.f32.gmra.mrb[0].mxu0 %v63
    %v149 = vpop.f32.mrb[0].mxu0
    %v150 = vadd.f32 %v50, %v149
    %v151 = vpop.f32.mrb[0].mxu0
    %152 = vdwg.mxu0
    %v153 = vmul.f32 %v135, 0.5
    %v154 = vmul.f32 %v140, 0.5
    %v155 = vmul.f32 %v145, 0.5
    %v156 = vmul.f32 %v150, 0.5
    %v157 = vmul.f32 %v135, 0.70710677
    %v158 = vmul.f32 %v140, 0.70710677
    %v159 = vmul.f32 %v145, 0.70710677
    %v160 = vmul.f32 %v150, 0.70710677
    %v161 = verf.f32.pop %v157
    %v162 = verf.f32.pop %v158
    %v163 = verf.f32.pop %v159
    %v164 = verf.f32.pop %v160
    %v165 = vadd.f32 %v161, 1.0
    %v166 = vadd.f32 %v162, 1.0
    %v167 = vadd.f32 %v163, 1.0
    %v168 = vadd.f32 %v164, 1.0
    %v169 = vmul.f32 %v153, %v165
    %v170 = vmul.f32 %v154, %v166
    %v171 = vmul.f32 %v155, %v167
    %v172 = vmul.f32 %v156, %v168
    %v173 = vld [vmem:[%s3] sm:$0xff]
    %v174 = vld [vmem:[%s3 + $0x8] sm:$0xff]
    %v175 = vld [vmem:[%s3 + $0x10] sm:$0xff]
    %v176 = vld [vmem:[%s3 + $0x18] sm:$0xff]
    %178 = vset.pattern.permute.xlu0 0
    %179 = vperm.xlu0 %178, %v173
    %v180 = vpop.permute.xlu0 %179
    %183 = vset.pattern.permute.xlu0 0
    %184 = vperm.xlu0 %183, %v174
    %v185 = vpop.permute.xlu0 %184
    %188 = vset.pattern.permute.xlu0 0
    %189 = vperm.xlu0 %188, %v175
    %v190 = vpop.permute.xlu0 %189
    %193 = vset.pattern.permute.xlu0 0
    %194 = vperm.xlu0 %193, %v176
    %v195 = vpop.permute.xlu0 %194
    %v197 = vmul.f32 %v169, %v180
    %v198 = vmul.f32 %v170, %v185
    %v199 = vmul.f32 %v171, %v190
    %v200 = vmul.f32 %v172, %v195
    %vm201 = vcmask 64512
    %v202 = vsel %vm201, %v197, 0.0
    %v203 = vsel %vm201, %v198, 0.0
    %v204 = vadd.f32 %v202, %v203
    %v205 = vsel %vm201, %v199, 0.0
    %v206 = vadd.f32 %v204, %v205
    %v207 = vsel %vm201, %v200, 0.0
    %v208 = vadd.f32 %v206, %v207
    %v209 = vrot.slane %v208, 4
    %v210 = vadd.f32 %v208, %v209
    %v211 = vrot.slane %v210, 2
    %v212 = vadd.f32 %v210, %v211
    %v213 = vrot.slane %v212, 1
    %v214 = vadd.f32 %v212, %v213
    %v215 = vld [vmem:[#allocation2] sm:$0x1]
    %217 = vset.pattern.permute.xlu0 0
    %218 = vperm.xlu0 %217, %v215
    %v219 = vpop.permute.xlu0 %218
    %v221 = vlaneseq
    %v222 = vshrl.u32 %v221, 7
    %v223 = vsub.s32 0, %v222
    %v224 = vrot.slane %v219, %v223
    %v225 = vadd.f32 %v214, %v224
    %v226 = vsub.f32 0.0, %v225
    %v227 = vmul.f32 %v226, 1.442695
    %v228 = vpow.pop %v227
    %v229 = vadd.f32 %v228, 1.0
    %v230 = vrcp.pop %v229
    %v231 = vmul.f32 1.0, %v230
    %v232 = vmul.f32 %v225, 1.442695
    %v233 = vpow.pop %v232
    %v234 = vadd.f32 %v233, 1.0
    %v235 = vrcp.pop %v234
    %v236 = vmul.f32 1.0, %v235
    %vm237 = vcmask 57344
    %238 = vst.msk [vmem:[#allocation3] sm:$0x1] %vm237, %v236
    %239 = vst.msk [vmem:[#allocation3 + $0x1] sm:$0x1] %vm237, %v231
    // Predicated region
    $region22: #{tpu_custom_call.1} parent=1 // pred_check
      _
    $region23: #{tpu_custom_call.1} parent=1 // pred_check_branch
      %241 = sbr.rel (0) target = $region25
    $region24: #{tpu_custom_call.1} parent=1 // pred_region
      %s243 = ssub.s32 32, 32
      %244 = vsyncadd [#allocation4], %s243
      %s246 = sshll.u32 [#allocation3], 4
      %s247 = int_to_ptr.vmem [resolvable:$true] %s246
      %249 = dma.vmem_to_hbm [thread:$0]  %s247, 32, %s5, [#allocation4]
    $region25: #{tpu_custom_call.1} parent=1 // pred_fallthru
      _
    // Predicated region
    $region26: #{tpu_custom_call.1} parent=1 // pred_check
      _
    $region27: #{tpu_custom_call.1} parent=1 // pred_check_branch
      %251 = sbr.rel (0) target = $region29
    $region28: #{tpu_custom_call.1} parent=1 // pred_region
      %252 = dma.done [#allocation4], 32
    $region29: #{tpu_custom_call.1} parent=1 // pred_fallthru
      _
    %253 = vsyncpa [#allocation4], 1

</llo_original>
